<compile_context>
chip_gen: v7x
topology: tpu7x:2x2x1
jax: 0.10.0
libtpu: 0.0.40
codegen_flags: <defaults>
</compile_context>

<pallas_src>
import jax
import jax.numpy as jnp
import numpy as np
from jax.experimental import pallas as pl
from jax.experimental.pallas import tpu as pltpu

EPS = 6.1e-05  # LayerNorm eps used by the module


# ------------------------------ Pallas kernel -------------------------------
def _patch_merging_kernel(x_ref, g_ref, b_ref, w_ref, o_ref):
    # x_ref : (rows, 4C)   merged tokens (rows = block of B * H/2 * W/2)
    # g_ref : (1, 4C)      LayerNorm gamma
    # b_ref : (1, 4C)      LayerNorm beta
    # w_ref : (4C, 2C)     reduction weight (Linear, no bias)
    # o_ref : (rows, 2C)
    x = x_ref[...]
    mu = jnp.mean(x, axis=-1, keepdims=True)
    var = jnp.mean((x - mu) ** 2, axis=-1, keepdims=True)
    xn = (x - mu) * jax.lax.rsqrt(var + EPS)          # rsqrt -> EUP slot
    xn = xn * g_ref[...] + b_ref[...]
    o_ref[...] = jnp.dot(xn, w_ref[...], preferred_element_type=jnp.float32)


# ------------------------------ host wrapper ---------------------------------
def patch_merging(x, gamma, beta, w_red, *, block_rows=None):
    """x: (B, C, H, W) -> (B, H/2 * W/2, 2C).  Matches the PyTorch forward."""
    B, C, H, W = x.shape
    Hh, Wh = H // 2, W // 2
    Lout = Hh * Wh
    M = B * Lout

    # Layout plumbing (wrapper-side): reproduce the torch
    # permute -> [x0,x1,x2,x3] strided slices -> concat -> view ordering.
    # feature index = (2*dw + dh)*C + c, token index = hh*Wh + ww.
    xp = jnp.transpose(x, (0, 2, 3, 1))                       # (B, H, W, C)
    xp = xp.reshape(B, Hh, 2, Wh, 2, C)                       # (b, hh, dh, ww, dw, c)
    xp = jnp.transpose(xp, (0, 1, 3, 4, 2, 5))                # (b, hh, ww, dw, dh, c)
    xm = xp.reshape(M, 4 * C)                                 # (B*Lout, 4C), lane-dense

    if block_rows is None:
        block_rows = M                                        # toy sizes: single block
    grid = (pl.cdiv(M, block_rows),)

    out = pl.pallas_call(
        _patch_merging_kernel,
        out_shape=jax.ShapeDtypeStruct((M, 2 * C), jnp.float32),
        grid=grid,
        in_specs=[
            pl.BlockSpec((block_rows, 4 * C), lambda i: (i, 0)),
            pl.BlockSpec((1, 4 * C), lambda i: (0, 0)),       # constant -> DMA once
            pl.BlockSpec((1, 4 * C), lambda i: (0, 0)),
            pl.BlockSpec((4 * C, 2 * C), lambda i: (0, 0)),
        ],
        out_specs=pl.BlockSpec((block_rows, 2 * C), lambda i: (i, 0)),
        compiler_params=pltpu.CompilerParams(
            dimension_semantics=("parallel",)),
    )(xm, gamma, beta, w_red)

    return out.reshape(B, Lout, 2 * C)


# --------------------------- pure-JAX reference ------------------------------
def patch_merging_ref(x, gamma, beta, w_red):
    B, C, H, W = x.shape
    xp = jnp.transpose(x, (0, 2, 3, 1))
    x0 = xp[:, 0::2, 0::2, :]
    x1 = xp[:, 1::2, 0::2, :]
    x2 = xp[:, 0::2, 1::2, :]
    x3 = xp[:, 1::2, 1::2, :]
    xc = jnp.concatenate([x0, x1, x2, x3], -1).reshape(B, -1, 4 * C)
    mu = jnp.mean(xc, axis=-1, keepdims=True)
    var = jnp.mean((xc - mu) ** 2, axis=-1, keepdims=True)
    xn = (xc - mu) / jnp.sqrt(var + EPS)
    xn = xn * gamma.reshape(-1) + beta.reshape(-1)
    return xn @ w_red


# ---------------------------------- main -------------------------------------
if __name__ == "__main__":
    B, C, H, W = 2, 4, 16, 16

    key = jax.random.PRNGKey(0)
    kx, kg, kb, kw = jax.random.split(key, 4)
    x = jax.random.normal(kx, (B, C, H, W), dtype=jnp.float32)
    gamma = 1.0 + 0.1 * jax.random.normal(kg, (1, 4 * C), dtype=jnp.float32)
    beta = 0.1 * jax.random.normal(kb, (1, 4 * C), dtype=jnp.float32)
    w_red = 0.02 * jax.random.normal(kw, (4 * C, 2 * C), dtype=jnp.float32)

    out = jax.jit(patch_merging)(x, gamma, beta, w_red)
    out = jax.block_until_ready(out)

    ref = patch_merging_ref(x, gamma, beta, w_red)
    assert out.shape == (B, (H // 2) * (W // 2), 2 * C)
    assert bool(jnp.all(jnp.isfinite(out)))
    np.testing.assert_allclose(np.asarray(out), np.asarray(ref),
                               rtol=1e-3, atol=1e-3)
    print("KERNEL_OK")
</pallas_src>

<mosaic_0001>
module attributes {stable_mosaic.version = 11 : i64} {
  func.func @_patch_merging_kernel(%arg0: i32, %arg1: memref<128x16xf32, #tpu.memory_space<vmem>>, %arg2: memref<1x16xf32, #tpu.memory_space<vmem>>, %arg3: memref<1x16xf32, #tpu.memory_space<vmem>>, %arg4: memref<16x8xf32, #tpu.memory_space<vmem>>, %arg5: memref<128x8xf32, #tpu.memory_space<vmem>>) attributes {dimension_semantics = [#tpu.dimension_semantics<parallel>], iteration_bounds = array<i64: 1>, scalar_prefetch = 0 : i64, scratch_operands = 0 : i64, tpu.core_type = #tpu.core_type<tc>, window_params = [{transform_indices = @transform_0, window_bounds = array<i64: 128, 16>}, {pipeline_mode = #tpu.pipeline_mode<synchronous>, transform_indices = @transform_1, window_bounds = array<i64: 1, 16>}, {pipeline_mode = #tpu.pipeline_mode<synchronous>, transform_indices = @transform_2, window_bounds = array<i64: 1, 16>}, {pipeline_mode = #tpu.pipeline_mode<synchronous>, transform_indices = @transform_3, window_bounds = array<i64: 16, 8>}, {transform_indices = @transform_4, window_bounds = array<i64: 128, 8>}]} {
    %c0 = arith.constant 0 : index
    %c0_0 = arith.constant 0 : index
    %0 = vector.load %arg1[%c0, %c0_0] : memref<128x16xf32, #tpu.memory_space<vmem>>, vector<128x16xf32>
    %cst = arith.constant dense<0.000000e+00> : vector<128xf32>
    %1 = vector.multi_reduction <add>, %0, %cst [1] : vector<128x16xf32> to vector<128xf32>
    %2 = vector.shape_cast %1 : vector<128xf32> to vector<128x1xf32>
    %cst_1 = arith.constant 1.600000e+01 : f32
    %3 = vector.broadcast %cst_1 : f32 to vector<128x1xf32>
    %4 = arith.divf %2, %3 : vector<128x1xf32>
    %5 = vector.broadcast %4 : vector<128x1xf32> to vector<128x16xf32>
    %6 = arith.subf %0, %5 : vector<128x16xf32>
    %7 = arith.mulf %6, %6 : vector<128x16xf32>
    %cst_2 = arith.constant dense<0.000000e+00> : vector<128xf32>
    %8 = vector.multi_reduction <add>, %7, %cst_2 [1] : vector<128x16xf32> to vector<128xf32>
    %9 = vector.shape_cast %8 : vector<128xf32> to vector<128x1xf32>
    %cst_3 = arith.constant 1.600000e+01 : f32
    %10 = vector.broadcast %cst_3 : f32 to vector<128x1xf32>
    %11 = arith.divf %9, %10 : vector<128x1xf32>
    %12 = vector.broadcast %4 : vector<128x1xf32> to vector<128x16xf32>
    %13 = arith.subf %0, %12 : vector<128x16xf32>
    %cst_4 = arith.constant 6.100000e-05 : f32
    %14 = vector.broadcast %cst_4 : f32 to vector<128x1xf32>
    %15 = arith.addf %11, %14 : vector<128x1xf32>
    %16 = math.rsqrt %15 : vector<128x1xf32>
    %17 = vector.broadcast %16 : vector<128x1xf32> to vector<128x16xf32>
    %18 = arith.mulf %13, %17 : vector<128x16xf32>
    %c0_5 = arith.constant 0 : index
    %c0_6 = arith.constant 0 : index
    %19 = vector.load %arg2[%c0_5, %c0_6] : memref<1x16xf32, #tpu.memory_space<vmem>>, vector<1x16xf32>
    %20 = vector.broadcast %19 : vector<1x16xf32> to vector<128x16xf32>
    %21 = arith.mulf %18, %20 : vector<128x16xf32>
    %c0_7 = arith.constant 0 : index
    %c0_8 = arith.constant 0 : index
    %22 = vector.load %arg3[%c0_7, %c0_8] : memref<1x16xf32, #tpu.memory_space<vmem>>, vector<1x16xf32>
    %23 = vector.broadcast %22 : vector<1x16xf32> to vector<128x16xf32>
    %24 = arith.addf %21, %23 : vector<128x16xf32>
    %c0_9 = arith.constant 0 : index
    %c0_10 = arith.constant 0 : index
    %25 = vector.load %arg4[%c0_9, %c0_10] : memref<16x8xf32, #tpu.memory_space<vmem>>, vector<16x8xf32>
    %cst_11 = arith.constant dense<0.000000e+00> : vector<128x8xf32>
    %26 = tpu.matmul %24, %25, %cst_11 {dimension_numbers = #tpu.dot_dimension_numbers<[1], [0], [0], [1], [0, 0, 1, 1], [], []>} : vector<128x16xf32>, vector<16x8xf32>, vector<128x8xf32> -> vector<128x8xf32>
    %c0_12 = arith.constant 0 : index
    %c0_13 = arith.constant 0 : index
    %27 = vector.load %arg5[%c0_12, %c0_13] : memref<128x8xf32, #tpu.memory_space<vmem>>, vector<128x8xf32>
    tpu.vector_store %arg5[%c0_12, %c0_13], %26 {strides = array<i32>} : memref<128x8xf32, #tpu.memory_space<vmem>>, vector<128x8xf32>,
    return
  }
  func.func @transform_0(%arg0: i32) -> (i32, i32) {
    %c0_i32 = arith.constant 0 : i32
    %c0_i32_0 = arith.constant 0 : i32
    return %arg0, %c0_i32 : i32, i32
  }
  func.func @transform_1(%arg0: i32) -> (i32, i32) {
    %c0_i32 = arith.constant 0 : i32
    %c0_i32_0 = arith.constant 0 : i32
    %c0_i32_1 = arith.constant 0 : i32
    return %c0_i32, %c0_i32_0 : i32, i32
  }
  func.func @transform_2(%arg0: i32) -> (i32, i32) {
    %c0_i32 = arith.constant 0 : i32
    %c0_i32_0 = arith.constant 0 : i32
    %c0_i32_1 = arith.constant 0 : i32
    return %c0_i32, %c0_i32_0 : i32, i32
  }
  func.func @transform_3(%arg0: i32) -> (i32, i32) {
    %c0_i32 = arith.constant 0 : i32
    %c0_i32_0 = arith.constant 0 : i32
    %c0_i32_1 = arith.constant 0 : i32
    return %c0_i32, %c0_i32_0 : i32, i32
  }
  func.func @transform_4(%arg0: i32) -> (i32, i32) {
    %c0_i32 = arith.constant 0 : i32
    %c0_i32_0 = arith.constant 0 : i32
    return %arg0, %c0_i32 : i32, i32
  }
}

</mosaic_0001>

<llo_original>
// kernel: patch_merging.1
$region0: #{patch_merging.1}
  #allocation0 [shape = 'u32[]', space=smem, size = 0x4, offset = 0x4, fixed_abs, tag = 'smem constant byte address 0x4 - core index']
  #allocation1 [shape = 'u32[144,128]{1,0:T(1,128)}', space=vmem, size = 0x12000, scoped, tag = 'internal scratch']
  %s0 = inlined_call_operand.vmem [shape: f32[128,16], index: 0, kind: input, shape index: {}]
  %s1 = inlined_call_operand.vmem [shape: f32[1,16], index: 1, kind: input, shape index: {}]
  %s2 = inlined_call_operand.vmem [shape: f32[1,16], index: 2, kind: input, shape index: {}]
  %s3 = inlined_call_operand.vmem [shape: f32[16,8], index: 3, kind: input, shape index: {}]
  %s4 = inlined_call_operand.vmem [shape: f32[128,8], index: 4, kind: output, shape index: {}]
  %s5 = sld [smem:[#allocation0]]
  $region26: #{patch_merging.1} parent=0
    _
  %s7 = ssub.s32 1, %s5
  %s8 = scalar_select 0, %s7, %s5
  // Predicated region
  $region2: #{patch_merging.1} parent=0 // pred_check
    _
  $region3: #{patch_merging.1} parent=0 // pred_check_branch
    %10 = sbr.rel (0) target = $region5
  $region4: #{patch_merging.1} parent=0 // pred_region
    _
  $region5: #{patch_merging.1} parent=0 // pred_fallthru
    _
  // Predicated region
  $region6: #{patch_merging.1} parent=0 // pred_check
    _
  $region7: #{patch_merging.1} parent=0 // pred_check_branch
    %12 = sbr.rel (0) target = $region9
  $region8: #{patch_merging.1} parent=0 // pred_region
    _
  $region9: #{patch_merging.1} parent=0 // pred_fallthru
    _
  // Predicated region
  $region10: #{patch_merging.1} parent=0 // pred_check
    _
  $region11: #{patch_merging.1} parent=0 // pred_check_branch
    %14 = sbr.rel (0) target = $region13
  $region12: #{patch_merging.1} parent=0 // pred_region
    _
  $region13: #{patch_merging.1} parent=0 // pred_fallthru
    _
  // Predicated region
  $region14: #{patch_merging.1} parent=0 // pred_check
    _
  $region15: #{patch_merging.1} parent=0 // pred_check_branch
    %16 = sbr.rel (0) target = $region17
  $region16: #{patch_merging.1} parent=0 // pred_region
    _
  $region17: #{patch_merging.1} parent=0 // pred_fallthru
    _
  %v17 = vld [vmem:[%s0] sm:$0xff]
  %v18 = vld [vmem:[%s0 + $0x8] sm:$0xff]
  %v19 = vld [vmem:[%s0 + $0x10] sm:$0xff]
  %v20 = vld [vmem:[%s0 + $0x18] sm:$0xff]
  %v21 = vld [vmem:[%s0 + $0x20] sm:$0xff]
  %v22 = vld [vmem:[%s0 + $0x28] sm:$0xff]
  %v23 = vld [vmem:[%s0 + $0x30] sm:$0xff]
  %v24 = vld [vmem:[%s0 + $0x38] sm:$0xff]
  %v25 = vld [vmem:[%s0 + $0x40] sm:$0xff]
  %v26 = vld [vmem:[%s0 + $0x48] sm:$0xff]
  %v27 = vld [vmem:[%s0 + $0x50] sm:$0xff]
  %v28 = vld [vmem:[%s0 + $0x58] sm:$0xff]
  %v29 = vld [vmem:[%s0 + $0x60] sm:$0xff]
  %v30 = vld [vmem:[%s0 + $0x68] sm:$0xff]
  %v31 = vld [vmem:[%s0 + $0x70] sm:$0xff]
  %v32 = vld [vmem:[%s0 + $0x78] sm:$0xff]
  %vm33 = vcmask 130048
  %v34 = vsel %vm33, %v17, 0.0
  %35 = vadd.xlane.f32.xlu0 %v34
  %v36 = vpop.xlane.xlu0 %35
  %v37 = vsel %vm33, %v18, 0.0
  %38 = vadd.xlane.f32.xlu0 %v37
  %v39 = vpop.xlane.xlu0 %38
  %v40 = vsel %vm33, %v19, 0.0
  %41 = vadd.xlane.f32.xlu0 %v40
  %v42 = vpop.xlane.xlu0 %41
  %v43 = vsel %vm33, %v20, 0.0
  %44 = vadd.xlane.f32.xlu0 %v43
  %v45 = vpop.xlane.xlu0 %44
  %v46 = vsel %vm33, %v21, 0.0
  %47 = vadd.xlane.f32.xlu0 %v46
  %v48 = vpop.xlane.xlu0 %47
  %v49 = vsel %vm33, %v22, 0.0
  %50 = vadd.xlane.f32.xlu0 %v49
  %v51 = vpop.xlane.xlu0 %50
  %v52 = vsel %vm33, %v23, 0.0
  %53 = vadd.xlane.f32.xlu0 %v52
  %v54 = vpop.xlane.xlu0 %53
  %v55 = vsel %vm33, %v24, 0.0
  %56 = vadd.xlane.f32.xlu0 %v55
  %v57 = vpop.xlane.xlu0 %56
  %v58 = vsel %vm33, %v25, 0.0
  %59 = vadd.xlane.f32.xlu0 %v58
  %v60 = vpop.xlane.xlu0 %59
  %v61 = vsel %vm33, %v26, 0.0
  %62 = vadd.xlane.f32.xlu0 %v61
  %v63 = vpop.xlane.xlu0 %62
  %v64 = vsel %vm33, %v27, 0.0
  %65 = vadd.xlane.f32.xlu0 %v64
  %v66 = vpop.xlane.xlu0 %65
  %v67 = vsel %vm33, %v28, 0.0
  %68 = vadd.xlane.f32.xlu0 %v67
  %v69 = vpop.xlane.xlu0 %68
  %v70 = vsel %vm33, %v29, 0.0
  %71 = vadd.xlane.f32.xlu0 %v70
  %v72 = vpop.xlane.xlu0 %71
  %v73 = vsel %vm33, %v30, 0.0
  %74 = vadd.xlane.f32.xlu0 %v73
  %v75 = vpop.xlane.xlu0 %74
  %v76 = vsel %vm33, %v31, 0.0
  %77 = vadd.xlane.f32.xlu0 %v76
  %v78 = vpop.xlane.xlu0 %77
  %v79 = vsel %vm33, %v32, 0.0
  %80 = vadd.xlane.f32.xlu0 %v79
  %v81 = vpop.xlane.xlu0 %80
  %v82 = vrcp.pop 16.0
  %v83 = vmul.f32 %v36, %v82
  %v84 = vmul.f32 %v39, %v82
  %v85 = vmul.f32 %v42, %v82
  %v86 = vmul.f32 %v45, %v82
  %v87 = vmul.f32 %v48, %v82
  %v88 = vmul.f32 %v51, %v82
  %v89 = vmul.f32 %v54, %v82
  %v90 = vmul.f32 %v57, %v82
  %v91 = vmul.f32 %v60, %v82
  %v92 = vmul.f32 %v63, %v82
  %v93 = vmul.f32 %v66, %v82
  %v94 = vmul.f32 %v69, %v82
  %v95 = vmul.f32 %v72, %v82
  %v96 = vmul.f32 %v75, %v82
  %v97 = vmul.f32 %v78, %v82
  %v98 = vmul.f32 %v81, %v82
  %v99 = vsub.f32 %v17, %v83
  %v100 = vsub.f32 %v18, %v84
  %v101 = vsub.f32 %v19, %v85
  %v102 = vsub.f32 %v20, %v86
  %v103 = vsub.f32 %v21, %v87
  %v104 = vsub.f32 %v22, %v88
  %v105 = vsub.f32 %v23, %v89
  %v106 = vsub.f32 %v24, %v90
  %v107 = vsub.f32 %v25, %v91
  %v108 = vsub.f32 %v26, %v92
  %v109 = vsub.f32 %v27, %v93
  %v110 = vsub.f32 %v28, %v94
  %v111 = vsub.f32 %v29, %v95
  %v112 = vsub.f32 %v30, %v96
  %v113 = vsub.f32 %v31, %v97
  %v114 = vsub.f32 %v32, %v98
  %v115 = vmul.f32 %v99, %v99
  %v116 = vmul.f32 %v100, %v100
  %v117 = vmul.f32 %v101, %v101
  %v118 = vmul.f32 %v102, %v102
  %v119 = vmul.f32 %v103, %v103
  %v120 = vmul.f32 %v104, %v104
  %v121 = vmul.f32 %v105, %v105
  %v122 = vmul.f32 %v106, %v106
  %v123 = vmul.f32 %v107, %v107
  %v124 = vmul.f32 %v108, %v108
  %v125 = vmul.f32 %v109, %v109
  %v126 = vmul.f32 %v110, %v110
  %v127 = vmul.f32 %v111, %v111
  %v128 = vmul.f32 %v112, %v112
  %v129 = vmul.f32 %v113, %v113
  %v130 = vmul.f32 %v114, %v114
  %v131 = vsel %vm33, %v115, 0.0
  %132 = vadd.xlane.f32.xlu0 %v131
  %v133 = vpop.xlane.xlu0 %132
  %v134 = vsel %vm33, %v116, 0.0
  %135 = vadd.xlane.f32.xlu0 %v134
  %v136 = vpop.xlane.xlu0 %135
  %v137 = vsel %vm33, %v117, 0.0
  %138 = vadd.xlane.f32.xlu0 %v137
  %v139 = vpop.xlane.xlu0 %138
  %v140 = vsel %vm33, %v118, 0.0
  %141 = vadd.xlane.f32.xlu0 %v140
  %v142 = vpop.xlane.xlu0 %141
  %v143 = vsel %vm33, %v119, 0.0
  %144 = vadd.xlane.f32.xlu0 %v143
  %v145 = vpop.xlane.xlu0 %144
  %v146 = vsel %vm33, %v120, 0.0
  %147 = vadd.xlane.f32.xlu0 %v146
  %v148 = vpop.xlane.xlu0 %147
  %v149 = vsel %vm33, %v121, 0.0
  %150 = vadd.xlane.f32.xlu0 %v149
  %v151 = vpop.xlane.xlu0 %150
  %v152 = vsel %vm33, %v122, 0.0
  %153 = vadd.xlane.f32.xlu0 %v152
  %v154 = vpop.xlane.xlu0 %153
  %v155 = vsel %vm33, %v123, 0.0
  %156 = vadd.xlane.f32.xlu0 %v155
  %v157 = vpop.xlane.xlu0 %156
  %v158 = vsel %vm33, %v124, 0.0
  %159 = vadd.xlane.f32.xlu0 %v158
  %v160 = vpop.xlane.xlu0 %159
  %v161 = vsel %vm33, %v125, 0.0
  %162 = vadd.xlane.f32.xlu0 %v161
  %v163 = vpop.xlane.xlu0 %162
  %v164 = vsel %vm33, %v126, 0.0
  %165 = vadd.xlane.f32.xlu0 %v164
  %v166 = vpop.xlane.xlu0 %165
  %v167 = vsel %vm33, %v127, 0.0
  %168 = vadd.xlane.f32.xlu0 %v167
  %v169 = vpop.xlane.xlu0 %168
  %v170 = vsel %vm33, %v128, 0.0
  %171 = vadd.xlane.f32.xlu0 %v170
  %v172 = vpop.xlane.xlu0 %171
  %v173 = vsel %vm33, %v129, 0.0
  %174 = vadd.xlane.f32.xlu0 %v173
  %v175 = vpop.xlane.xlu0 %174
  %v176 = vsel %vm33, %v130, 0.0
  %177 = vadd.xlane.f32.xlu0 %v176
  %v178 = vpop.xlane.xlu0 %177
  %v179 = vmul.f32 %v133, %v82
  %v180 = vmul.f32 %v136, %v82
  %v181 = vmul.f32 %v139, %v82
  %v182 = vmul.f32 %v142, %v82
  %v183 = vmul.f32 %v145, %v82
  %v184 = vmul.f32 %v148, %v82
  %v185 = vmul.f32 %v151, %v82
  %v186 = vmul.f32 %v154, %v82
  %v187 = vmul.f32 %v157, %v82
  %v188 = vmul.f32 %v160, %v82
  %v189 = vmul.f32 %v163, %v82
  %v190 = vmul.f32 %v166, %v82
  %v191 = vmul.f32 %v169, %v82
  %v192 = vmul.f32 %v172, %v82
  %v193 = vmul.f32 %v175, %v82
  %v194 = vmul.f32 %v178, %v82
  %v195 = vadd.f32 %v179, 6.1e-05
  %v196 = vadd.f32 %v180, 6.1e-05
  %v197 = vadd.f32 %v181, 6.1e-05
  %v198 = vadd.f32 %v182, 6.1e-05
  %v199 = vadd.f32 %v183, 6.1e-05
  %v200 = vadd.f32 %v184, 6.1e-05
  %v201 = vadd.f32 %v185, 6.1e-05
  %v202 = vadd.f32 %v186, 6.1e-05
  %v203 = vadd.f32 %v187, 6.1e-05
  %v204 = vadd.f32 %v188, 6.1e-05
  %v205 = vadd.f32 %v189, 6.1e-05
  %v206 = vadd.f32 %v190, 6.1e-05
  %v207 = vadd.f32 %v191, 6.1e-05
  %v208 = vadd.f32 %v192, 6.1e-05
  %v209 = vadd.f32 %v193, 6.1e-05
  %v210 = vadd.f32 %v194, 6.1e-05
  %v211 = vrsqrt.pop %v195
  %v212 = vrsqrt.pop %v196
  %v213 = vrsqrt.pop %v197
  %v214 = vrsqrt.pop %v198
  %v215 = vrsqrt.pop %v199
  %v216 = vrsqrt.pop %v200
  %v217 = vrsqrt.pop %v201
  %v218 = vrsqrt.pop %v202
  %v219 = vrsqrt.pop %v203
  %v220 = vrsqrt.pop %v204
  %v221 = vrsqrt.pop %v205
  %v222 = vrsqrt.pop %v206
  %v223 = vrsqrt.pop %v207
  %v224 = vrsqrt.pop %v208
  %v225 = vrsqrt.pop %v209
  %v226 = vrsqrt.pop %v210
  %v227 = vmul.f32 %v99, %v211
  %v228 = vmul.f32 %v100, %v212
  %v229 = vmul.f32 %v101, %v213
  %v230 = vmul.f32 %v102, %v214
  %v231 = vmul.f32 %v103, %v215
  %v232 = vmul.f32 %v104, %v216
  %v233 = vmul.f32 %v105, %v217
  %v234 = vmul.f32 %v106, %v218
  %v235 = vmul.f32 %v107, %v219
  %v236 = vmul.f32 %v108, %v220
  %v237 = vmul.f32 %v109, %v221
  %v238 = vmul.f32 %v110, %v222
  %v239 = vmul.f32 %v111, %v223
  %v240 = vmul.f32 %v112, %v224
  %v241 = vmul.f32 %v113, %v225
  %v242 = vmul.f32 %v114, %v226
  %v243 = vld [vmem:[%s1] sm:$0x1]
  %v245 = vlaneseq
  %v246 = vshrl.u32 %v245, 7
  %v247 = vsub.s32 0, %v246
  %v248 = vrot.slane %v243, %v247
  %v250 = vmul.f32 %v227, %v248
  %v251 = vmul.f32 %v228, %v248
  %v252 = vmul.f32 %v229, %v248
  %v253 = vmul.f32 %v230, %v248
  %v254 = vmul.f32 %v231, %v248
  %v255 = vmul.f32 %v232, %v248
  %v256 = vmul.f32 %v233, %v248
  %v257 = vmul.f32 %v234, %v248
  %v258 = vmul.f32 %v235, %v248
  %v259 = vmul.f32 %v236, %v248
  %v260 = vmul.f32 %v237, %v248
  %v261 = vmul.f32 %v238, %v248
  %v262 = vmul.f32 %v239, %v248
  %v263 = vmul.f32 %v240, %v248
  %v264 = vmul.f32 %v241, %v248
  %v265 = vmul.f32 %v242, %v248
  %v266 = vld [vmem:[%s2] sm:$0x1]
  %v268 = vlaneseq
  %v269 = vshrl.u32 %v268, 7
  %v270 = vsub.s32 0, %v269
  %v271 = vrot.slane %v266, %v270
  %v273 = vadd.f32 %v250, %v271
  %v274 = vadd.f32 %v251, %v271
  %v275 = vadd.f32 %v252, %v271
  %v276 = vadd.f32 %v253, %v271
  %v277 = vadd.f32 %v254, %v271
  %v278 = vadd.f32 %v255, %v271
  %v279 = vadd.f32 %v256, %v271
  %v280 = vadd.f32 %v257, %v271
  %v281 = vadd.f32 %v258, %v271
  %v282 = vadd.f32 %v259, %v271
  %v283 = vadd.f32 %v260, %v271
  %v284 = vadd.f32 %v261, %v271
  %v285 = vadd.f32 %v262, %v271
  %v286 = vadd.f32 %v263, %v271
  %v287 = vadd.f32 %v264, %v271
  %v288 = vadd.f32 %v265, %v271
  %v289 = vld [vmem:[%s3] sm:$0xff]
  %v290 = vld [vmem:[%s3 + $0x8] sm:$0xff]
  %v292 = vsel %vm33, %v273, 0
  %v295 = vsel %vm33, %v274, 0
  %v298 = vsel %vm33, %v275, 0
  %v301 = vsel %vm33, %v276, 0
  %v304 = vsel %vm33, %v277, 0
  %v307 = vsel %vm33, %v278, 0
  %v310 = vsel %vm33, %v279, 0
  %v313 = vsel %vm33, %v280, 0
  %v316 = vsel %vm33, %v281, 0
  %v319 = vsel %vm33, %v282, 0
  %v322 = vsel %vm33, %v283, 0
  %v325 = vsel %vm33, %v284, 0
  %v328 = vsel %vm33, %v285, 0
  %v331 = vsel %vm33, %v286, 0
  %v334 = vsel %vm33, %v287, 0
  %v337 = vsel %vm33, %v288, 0
  %339 = vmatprep.subr.mxu0 0.0
  %340 = vmatpush1.msra.mxu0 %v289
  %341 = vmatprep.subr.mxu0 0.0
  %342 = vmatpush1.msra.mxu0 %v290
  %343 = vmatprep.subr.mxu0 0.0
  %344 = vmatpush1.msra.mxu0 0.0
  %345 = vmatprep.subr.mxu0 0.0
  %346 = vmatpush1.msra.mxu0 0.0
  %347 = vmatprep.subr.mxu0 0.0
  %348 = vmatpush1.msra.mxu0 0.0
  %349 = vmatprep.subr.mxu0 0.0
  %350 = vmatpush1.msra.mxu0 0.0
  %351 = vmatprep.subr.mxu0 0.0
  %352 = vmatpush1.msra.mxu0 0.0
  %353 = vmatprep.subr.mxu0 0.0
  %354 = vmatpush1.msra.mxu0 0.0
  %355 = vmatprep.subr.mxu0 0.0
  %356 = vmatpush1.msra.mxu0 0.0
  %357 = vmatprep.subr.mxu0 0.0
  %358 = vmatpush1.msra.mxu0 0.0
  %359 = vmatprep.subr.mxu0 0.0
  %360 = vmatpush1.msra.mxu0 0.0
  %361 = vmatprep.subr.mxu0 0.0
  %362 = vmatpush1.msra.mxu0 0.0
  %363 = vmatprep.subr.mxu0 0.0
  %364 = vmatpush1.msra.mxu0 0.0
  %365 = vmatprep.subr.mxu0 0.0
  %366 = vmatpush1.msra.mxu0 0.0
  %367 = vmatprep.subr.mxu0 0.0
  %368 = vmatpush1.msra.mxu0 0.0
  %369 = vmatprep.subr.mxu0 0.0
  %370 = vmatpush1.msra.mxu0 0.0
  %371 = vmatprep.subr.mxu0 0.0
  %372 = vmatpush1.msra.mxu0 0.0
  %373 = vmatprep.subr.mxu0 0.0
  %374 = vmatpush1.msra.mxu0 0.0
  %375 = vmatprep.subr.mxu0 0.0
  %376 = vmatpush1.msra.mxu0 0.0
  %377 = vmatprep.subr.mxu0 0.0
  %378 = vmatpush1.msra.mxu0 0.0
  %379 = vmatprep.subr.mxu0 0.0
  %380 = vmatpush1.msra.mxu0 0.0
  %381 = vmatprep.subr.mxu0 0.0
  %382 = vmatpush1.msra.mxu0 0.0
  %383 = vmatprep.subr.mxu0 0.0
  %384 = vmatpush1.msra.mxu0 0.0
  %385 = vmatprep.subr.mxu0 0.0
  %386 = vmatpush1.msra.mxu0 0.0
  %387 = vmatprep.subr.mxu0 0.0
  %388 = vmatpush1.msra.mxu0 0.0
  %389 = vmatprep.subr.mxu0 0.0
  %390 = vmatpush1.msra.mxu0 0.0
  %391 = vmatprep.subr.mxu0 0.0
  %392 = vmatpush1.msra.mxu0 0.0
  %393 = vmatprep.subr.mxu0 0.0
  %394 = vmatpush1.msra.mxu0 0.0
  %395 = vmatprep.subr.mxu0 0.0
  %396 = vmatpush1.msra.mxu0 0.0
  %397 = vmatprep.subr.mxu0 0.0
  %398 = vmatpush1.msra.mxu0 0.0
  %399 = vmatprep.subr.mxu0 0.0
  %400 = vmatpush1.msra.mxu0 0.0
  %401 = vmatprep.subr.mxu0 0.0
  %402 = vmatpush1.msra.mxu0 0.0
  %403 = vmatprep.mubr.f32.mxu0 0.0
  %404 = vmatmul.mubr.f32.gmra.mrb[0].mxu0 %v292
  %v405 = vpop.f32.mrb[0].mxu0
  %v406 = vadd.f32 0.0, %v405
  %v407 = vpop.f32.mrb[0].mxu0
  %408 = vmatprep.mubr.f32.mxu0 0.0
  %409 = vmatmul.mubr.f32.gmra.mrb[0].mxu0 %v295
  %v410 = vpop.f32.mrb[0].mxu0
  %v411 = vadd.f32 0.0, %v410
  %v412 = vpop.f32.mrb[0].mxu0
  %413 = vmatprep.mubr.f32.mxu0 0.0
  %414 = vmatmul.mubr.f32.gmra.mrb[0].mxu0 %v298
  %v415 = vpop.f32.mrb[0].mxu0
  %v416 = vadd.f32 0.0, %v415
  %v417 = vpop.f32.mrb[0].mxu0
  %418 = vmatprep.mubr.f32.mxu0 0.0
  %419 = vmatmul.mubr.f32.gmra.mrb[0].mxu0 %v301
  %v420 = vpop.f32.mrb[0].mxu0
  %v421 = vadd.f32 0.0, %v420
  %v422 = vpop.f32.mrb[0].mxu0
  %423 = vmatprep.mubr.f32.mxu0 0.0
  %424 = vmatmul.mubr.f32.gmra.mrb[0].mxu0 %v304
  %v425 = vpop.f32.mrb[0].mxu0
  %v426 = vadd.f32 0.0, %v425
  %v427 = vpop.f32.mrb[0].mxu0
  %428 = vmatprep.mubr.f32.mxu0 0.0
  %429 = vmatmul.mubr.f32.gmra.mrb[0].mxu0 %v307
  %v430 = vpop.f32.mrb[0].mxu0
  %v431 = vadd.f32 0.0, %v430
  %v432 = vpop.f32.mrb[0].mxu0
  %433 = vmatprep.mubr.f32.mxu0 0.0
  %434 = vmatmul.mubr.f32.gmra.mrb[0].mxu0 %v310
  %v435 = vpop.f32.mrb[0].mxu0
  %v436 = vadd.f32 0.0, %v435
  %v437 = vpop.f32.mrb[0].mxu0
  %438 = vmatprep.mubr.f32.mxu0 0.0
  %439 = vmatmul.mubr.f32.gmra.mrb[0].mxu0 %v313
  %v440 = vpop.f32.mrb[0].mxu0
  %v441 = vadd.f32 0.0, %v440
  %v442 = vpop.f32.mrb[0].mxu0
  %443 = vmatprep.mubr.f32.mxu0 0.0
  %444 = vmatmul.mubr.f32.gmra.mrb[0].mxu0 %v316
  %v445 = vpop.f32.mrb[0].mxu0
  %v446 = vadd.f32 0.0, %v445
  %v447 = vpop.f32.mrb[0].mxu0
  %448 = vmatprep.mubr.f32.mxu0 0.0
  %449 = vmatmul.mubr.f32.gmra.mrb[0].mxu0 %v319
  %v450 = vpop.f32.mrb[0].mxu0
  %v451 = vadd.f32 0.0, %v450
  %v452 = vpop.f32.mrb[0].mxu0
  %453 = vmatprep.mubr.f32.mxu0 0.0
  %454 = vmatmul.mubr.f32.gmra.mrb[0].mxu0 %v322
  %v455 = vpop.f32.mrb[0].mxu0
  %v456 = vadd.f32 0.0, %v455
  %v457 = vpop.f32.mrb[0].mxu0
  %458 = vmatprep.mubr.f32.mxu0 0.0
  %459 = vmatmul.mubr.f32.gmra.mrb[0].mxu0 %v325
  %v460 = vpop.f32.mrb[0].mxu0
  %v461 = vadd.f32 0.0, %v460
  %v462 = vpop.f32.mrb[0].mxu0
  %463 = vmatprep.mubr.f32.mxu0 0.0
  %464 = vmatmul.mubr.f32.gmra.mrb[0].mxu0 %v328
  %v465 = vpop.f32.mrb[0].mxu0
  %v466 = vadd.f32 0.0, %v465
  %v467 = vpop.f32.mrb[0].mxu0
  %468 = vmatprep.mubr.f32.mxu0 0.0
  %469 = vmatmul.mubr.f32.gmra.mrb[0].mxu0 %v331
  %v470 = vpop.f32.mrb[0].mxu0
  %v471 = vadd.f32 0.0, %v470
  %v472 = vpop.f32.mrb[0].mxu0
  %473 = vmatprep.mubr.f32.mxu0 0.0
  %474 = vmatmul.mubr.f32.gmra.mrb[0].mxu0 %v334
  %v475 = vpop.f32.mrb[0].mxu0
  %v476 = vadd.f32 0.0, %v475
  %v477 = vpop.f32.mrb[0].mxu0
  %478 = vmatprep.mubr.f32.mxu0 0.0
  %479 = vmatmul.mubr.f32.gmra.mrb[0].mxu0 %v337
  %v480 = vpop.f32.mrb[0].mxu0
  %v481 = vadd.f32 0.0, %v480
  %v482 = vpop.f32.mrb[0].mxu0
  %483 = vdwg.mxu0
  %vm484 = vcmask 64512
  %485 = vst.msk [vmem:[%s4] sm:$0xff] %vm484, %v406
  %486 = vst.msk [vmem:[%s4 + $0x8] sm:$0xff] %vm484, %v411
  %487 = vst.msk [vmem:[%s4 + $0x10] sm:$0xff] %vm484, %v416
  %488 = vst.msk [vmem:[%s4 + $0x18] sm:$0xff] %vm484, %v421
  %489 = vst.msk [vmem:[%s4 + $0x20] sm:$0xff] %vm484, %v426
  %490 = vst.msk [vmem:[%s4 + $0x28] sm:$0xff] %vm484, %v431
  %491 = vst.msk [vmem:[%s4 + $0x30] sm:$0xff] %vm484, %v436
  %492 = vst.msk [vmem:[%s4 + $0x38] sm:$0xff] %vm484, %v441
  %493 = vst.msk [vmem:[%s4 + $0x40] sm:$0xff] %vm484, %v446
  %494 = vst.msk [vmem:[%s4 + $0x48] sm:$0xff] %vm484, %v451
  %495 = vst.msk [vmem:[%s4 + $0x50] sm:$0xff] %vm484, %v456
  %496 = vst.msk [vmem:[%s4 + $0x58] sm:$0xff] %vm484, %v461
  %497 = vst.msk [vmem:[%s4 + $0x60] sm:$0xff] %vm484, %v466
  %498 = vst.msk [vmem:[%s4 + $0x68] sm:$0xff] %vm484, %v471
  %499 = vst.msk [vmem:[%s4 + $0x70] sm:$0xff] %vm484, %v476
  %500 = vst.msk [vmem:[%s4 + $0x78] sm:$0xff] %vm484, %v481
  // Predicated region
  $region18: #{patch_merging.1} parent=0 // pred_check
    _
  $region19: #{patch_merging.1} parent=0 // pred_check_branch
    %502 = sbr.rel (0) target = $region21
  $region20: #{patch_merging.1} parent=0 // pred_region
    _
  $region21: #{patch_merging.1} parent=0 // pred_fallthru
    _
  // Predicated region
  $region22: #{patch_merging.1} parent=0 // pred_check
    _
  $region23: #{patch_merging.1} parent=0 // pred_check_branch
    %504 = sbr.rel (0) target = $region25
  $region24: #{patch_merging.1} parent=0 // pred_region
    _
  $region25: #{patch_merging.1} parent=0 // pred_fallthru
    _

</llo_original>
